<compile_context>
chip_gen: v6e
topology: v6e:2x2x1
jax: 0.10.0
libtpu: 0.0.40
codegen_flags: <defaults>
</compile_context>

<pallas_src>
import jax
import jax.numpy as jnp
from jax.experimental import pallas as pl
from jax.experimental.pallas import tpu as pltpu


def linear_kernel(x_ref, w_ref, b_ref, o_ref):
    # x_ref: [B, IN], w_ref: [IN, OUT] (pre-transposed, MXU-native), b_ref: [1, OUT].
    acc = jnp.dot(x_ref[...], w_ref[...], preferred_element_type=jnp.float32)
    o_ref[...] = (acc + b_ref[...]).astype(o_ref.dtype)


def _linear_forward(x, weight_t, bias2):
    """x: [B, 300] f32, weight_t: [300, 4] f32 (pre-transposed), bias2: [1, 4] f32 -> [B, 4] f32."""
    B = x.shape[0]
    OUT = weight_t.shape[1]
    vmem = pl.BlockSpec(memory_space=pltpu.MemorySpace.VMEM)
    return pl.pallas_call(
        linear_kernel,
        out_shape=jax.ShapeDtypeStruct((B, OUT), jnp.float32),
        in_specs=[vmem, vmem, vmem],
        out_specs=vmem,
    )(x, weight_t, bias2)


linear_forward = jax.jit(_linear_forward)


if __name__ == "__main__":
    key = jax.random.PRNGKey(0)
    k_x, k_w, k_b = jax.random.split(key, 3)

    B, IN_F, OUT_F = 8, 300, 4

    # Deterministic parameter init (matches nn.Linear's uniform(-1/sqrt(in), 1/sqrt(in))).
    # Parameters are STORED in the layouts the kernel consumes: weight_t [IN, OUT],
    # bias2 [1, OUT] — one-time init cost, zero per-call layout ops.
    bound = 1.0 / jnp.sqrt(jnp.float32(IN_F))
    weight_t = jax.random.uniform(k_w, (IN_F, OUT_F), jnp.float32, -bound, bound)
    bias2 = jax.random.uniform(k_b, (1, OUT_F), jnp.float32, -bound, bound)

    x = jax.random.normal(k_x, (B, IN_F), jnp.float32)

    logits = linear_forward(x, weight_t, bias2)
    jax.block_until_ready(logits)

    # Reference check against plain JAX (same math as PyTorch: x @ W^T + b).
    ref = x @ weight_t + bias2
    assert logits.shape == (B, OUT_F)
    assert jnp.allclose(logits, ref, atol=1e-4, rtol=1e-4)

    print("KERNEL_OK")
</pallas_src>

<mosaic_0001>
module attributes {stable_mosaic.version = 11 : i64} {
  func.func @linear_kernel(%arg0: memref<8x300xf32, #tpu.memory_space<vmem>>, %arg1: memref<300x4xf32, #tpu.memory_space<vmem>>, %arg2: memref<1x4xf32, #tpu.memory_space<vmem>>, %arg3: memref<8x4xf32, #tpu.memory_space<vmem>>) attributes {dimension_semantics = [], scalar_prefetch = 0 : i64, scratch_operands = 0 : i64, tpu.core_type = #tpu.core_type<tc>} {
    %c0 = arith.constant 0 : index
    %c0_0 = arith.constant 0 : index
    %0 = vector.load %arg0[%c0, %c0_0] : memref<8x300xf32, #tpu.memory_space<vmem>>, vector<8x300xf32>
    %c0_1 = arith.constant 0 : index
    %c0_2 = arith.constant 0 : index
    %1 = vector.load %arg1[%c0_1, %c0_2] : memref<300x4xf32, #tpu.memory_space<vmem>>, vector<300x4xf32>
    %cst = arith.constant dense<0.000000e+00> : vector<8x4xf32>
    %2 = tpu.matmul %0, %1, %cst {dimension_numbers = #tpu.dot_dimension_numbers<[1], [0], [0], [1], [0, 0, 1, 1], [], []>} : vector<8x300xf32>, vector<300x4xf32>, vector<8x4xf32> -> vector<8x4xf32>
    %c0_3 = arith.constant 0 : index
    %c0_4 = arith.constant 0 : index
    %3 = vector.load %arg2[%c0_3, %c0_4] : memref<1x4xf32, #tpu.memory_space<vmem>>, vector<1x4xf32>
    %4 = vector.broadcast %3 : vector<1x4xf32> to vector<8x4xf32>
    %5 = arith.addf %2, %4 : vector<8x4xf32>
    %c0_5 = arith.constant 0 : index
    %c0_6 = arith.constant 0 : index
    %6 = vector.load %arg3[%c0_5, %c0_6] : memref<8x4xf32, #tpu.memory_space<vmem>>, vector<8x4xf32>
    tpu.vector_store %arg3[%c0_5, %c0_6], %5 {strides = array<i32>} : memref<8x4xf32, #tpu.memory_space<vmem>>, vector<8x4xf32>,
    return
  }
}

</mosaic_0001>

<llo_original>
// kernel: _linear_forward.1
$region0: #{_linear_forward.1}
  #allocation0 [shape = 'u32[]', space=smem, size = 0x4, offset = 0x4, fixed_abs, tag = 'smem constant byte address 0x4 - core index']
  #allocation1 [shape = 'u32[144,128]{1,0:T(1,128)}', space=vmem, size = 0x12000, scoped, tag = 'internal scratch']
  %s0 = inlined_call_operand.vmem [shape: f32[8,300], index: 0, kind: input, shape index: {}]
  %s1 = inlined_call_operand.vmem [shape: f32[300,4], index: 1, kind: input, shape index: {}]
  %s2 = inlined_call_operand.vmem [shape: f32[1,4], index: 2, kind: input, shape index: {}]
  %s3 = inlined_call_operand.vmem [shape: f32[8,4], index: 3, kind: output, shape index: {}]
  %s4 = sld [smem:[#allocation0]]
  $region22: #{_linear_forward.1} parent=0
    _
  %s6 = ssub.s32 1, %s4
  %s7 = scalar_select 0, %s6, %s4
  // Predicated region
  $region2: #{_linear_forward.1} parent=0 // pred_check
    _
  $region3: #{_linear_forward.1} parent=0 // pred_check_branch
    %9 = sbr.rel (0) target = $region5
  $region4: #{_linear_forward.1} parent=0 // pred_region
    _
  $region5: #{_linear_forward.1} parent=0 // pred_fallthru
    _
  // Predicated region
  $region6: #{_linear_forward.1} parent=0 // pred_check
    _
  $region7: #{_linear_forward.1} parent=0 // pred_check_branch
    %11 = sbr.rel (0) target = $region9
  $region8: #{_linear_forward.1} parent=0 // pred_region
    _
  $region9: #{_linear_forward.1} parent=0 // pred_fallthru
    _
  // Predicated region
  $region10: #{_linear_forward.1} parent=0 // pred_check
    _
  $region11: #{_linear_forward.1} parent=0 // pred_check_branch
    %13 = sbr.rel (0) target = $region13
  $region12: #{_linear_forward.1} parent=0 // pred_region
    _
  $region13: #{_linear_forward.1} parent=0 // pred_fallthru
    _
  %v14 = vld [vmem:[%s0] sm:$0xff]
  %v15 = vld [vmem:[%s0 + $0x8] sm:$0xff]
  %v16 = vld [vmem:[%s0 + $0x10] sm:$0xff]
  %v17 = vld [vmem:[%s1] sm:$0xff]
  %v18 = vld [vmem:[%s1 + $0x8] sm:$0xff]
  %v19 = vld [vmem:[%s1 + $0x10] sm:$0xff]
  %v20 = vld [vmem:[%s1 + $0x18] sm:$0xff]
  %v21 = vld [vmem:[%s1 + $0x20] sm:$0xff]
  %v22 = vld [vmem:[%s1 + $0x28] sm:$0xff]
  %v23 = vld [vmem:[%s1 + $0x30] sm:$0xff]
  %v24 = vld [vmem:[%s1 + $0x38] sm:$0xff]
  %v25 = vld [vmem:[%s1 + $0x40] sm:$0xff]
  %v26 = vld [vmem:[%s1 + $0x48] sm:$0xff]
  %v27 = vld [vmem:[%s1 + $0x50] sm:$0xff]
  %v28 = vld [vmem:[%s1 + $0x58] sm:$0xff]
  %v29 = vld [vmem:[%s1 + $0x60] sm:$0xff]
  %v30 = vld [vmem:[%s1 + $0x68] sm:$0xff]
  %v31 = vld [vmem:[%s1 + $0x70] sm:$0xff]
  %v32 = vld [vmem:[%s1 + $0x78] sm:$0xff]
  %v33 = vld [vmem:[%s1 + $0x80] sm:$0xff]
  %v34 = vld [vmem:[%s1 + $0x88] sm:$0xff]
  %v35 = vld [vmem:[%s1 + $0x90] sm:$0xff]
  %v36 = vld [vmem:[%s1 + $0x98] sm:$0xff]
  %v37 = vld [vmem:[%s1 + $0xa0] sm:$0xff]
  %v38 = vld [vmem:[%s1 + $0xa8] sm:$0xff]
  %v39 = vld [vmem:[%s1 + $0xb0] sm:$0xff]
  %v40 = vld [vmem:[%s1 + $0xb8] sm:$0xff]
  %v41 = vld [vmem:[%s1 + $0xc0] sm:$0xff]
  %v42 = vld [vmem:[%s1 + $0xc8] sm:$0xff]
  %v43 = vld [vmem:[%s1 + $0xd0] sm:$0xff]
  %v44 = vld [vmem:[%s1 + $0xd8] sm:$0xff]
  %v45 = vld [vmem:[%s1 + $0xe0] sm:$0xff]
  %v46 = vld [vmem:[%s1 + $0xe8] sm:$0xff]
  %v47 = vld [vmem:[%s1 + $0xf0] sm:$0xff]
  %v48 = vld [vmem:[%s1 + $0xf8] sm:$0xff]
  %v49 = vld [vmem:[%s1 + $0x100] sm:$0xff]
  %v50 = vld [vmem:[%s1 + $0x108] sm:$0xff]
  %v51 = vld [vmem:[%s1 + $0x110] sm:$0xff]
  %v52 = vld [vmem:[%s1 + $0x118] sm:$0xff]
  %v53 = vld [vmem:[%s1 + $0x120] sm:$0xff]
  %v54 = vld [vmem:[%s1 + $0x128] sm:$0xf]
  %v55 = vld [vmem:[%s2] sm:$0x1]
  %v57 = vlaneseq
  %v58 = vshrl.u32 %v57, 7
  %v59 = vsub.s32 0, %v58
  %v60 = vrot.slane %v55, %v59
  %vm62 = vcmask 359424
  %v64 = vsel %vm62, %v16, 0
  %vm66 = vcmask 1043456
  %v68 = vsel %vm66, %v54, 0
  %70 = vmatprep.subr.mxu0 0.0
  %71 = vmatpush1.msra.mxu0 %v32
  %72 = vmatprep.subr.mxu0 0.0
  %73 = vmatpush1.msra.mxu0 %v31
  %74 = vmatprep.subr.mxu0 0.0
  %75 = vmatpush1.msra.mxu0 %v30
  %76 = vmatprep.subr.mxu0 0.0
  %77 = vmatpush1.msra.mxu0 %v29
  %78 = vmatprep.subr.mxu0 0.0
  %79 = vmatpush1.msra.mxu0 %v28
  %80 = vmatprep.subr.mxu0 0.0
  %81 = vmatpush1.msra.mxu0 %v27
  %82 = vmatprep.subr.mxu0 0.0
  %83 = vmatpush1.msra.mxu0 %v26
  %84 = vmatprep.subr.mxu0 0.0
  %85 = vmatpush1.msra.mxu0 %v25
  %86 = vmatprep.subr.mxu0 0.0
  %87 = vmatpush1.msra.mxu0 %v24
  %88 = vmatprep.subr.mxu0 0.0
  %89 = vmatpush1.msra.mxu0 %v23
  %90 = vmatprep.subr.mxu0 0.0
  %91 = vmatpush1.msra.mxu0 %v22
  %92 = vmatprep.subr.mxu0 0.0
  %93 = vmatpush1.msra.mxu0 %v21
  %94 = vmatprep.subr.mxu0 0.0
  %95 = vmatpush1.msra.mxu0 %v20
  %96 = vmatprep.subr.mxu0 0.0
  %97 = vmatpush1.msra.mxu0 %v19
  %98 = vmatprep.subr.mxu0 0.0
  %99 = vmatpush1.msra.mxu0 %v18
  %100 = vmatprep.subr.mxu0 0.0
  %101 = vmatpush1.msra.mxu0 %v17
  %102 = vmatprep.subr.mxu0 0.0
  %103 = vmatpush2.msra.mxu0 %v48
  %104 = vmatprep.subr.mxu0 0.0
  %105 = vmatpush2.msra.mxu0 %v47
  %106 = vmatprep.subr.mxu0 0.0
  %107 = vmatpush2.msra.mxu0 %v46
  %108 = vmatprep.subr.mxu0 0.0
  %109 = vmatpush2.msra.mxu0 %v45
  %110 = vmatprep.subr.mxu0 0.0
  %111 = vmatpush2.msra.mxu0 %v44
  %112 = vmatprep.subr.mxu0 0.0
  %113 = vmatpush2.msra.mxu0 %v43
  %114 = vmatprep.subr.mxu0 0.0
  %115 = vmatpush2.msra.mxu0 %v42
  %116 = vmatprep.subr.mxu0 0.0
  %117 = vmatpush2.msra.mxu0 %v41
  %118 = vmatprep.subr.mxu0 0.0
  %119 = vmatpush2.msra.mxu0 %v40
  %120 = vmatprep.subr.mxu0 0.0
  %121 = vmatpush2.msra.mxu0 %v39
  %122 = vmatprep.subr.mxu0 0.0
  %123 = vmatpush2.msra.mxu0 %v38
  %124 = vmatprep.subr.mxu0 0.0
  %125 = vmatpush2.msra.mxu0 %v37
  %126 = vmatprep.subr.mxu0 0.0
  %127 = vmatpush2.msra.mxu0 %v36
  %128 = vmatprep.subr.mxu0 0.0
  %129 = vmatpush2.msra.mxu0 %v35
  %130 = vmatprep.subr.mxu0 0.0
  %131 = vmatpush2.msra.mxu0 %v34
  %132 = vmatprep.subr.mxu0 0.0
  %133 = vmatpush2.msra.mxu0 %v33
  %134 = vmatprep.mubr.f32.mxu0 %v15
  %135 = vmatmul.mubr.f32.gmra.mxu0 %v14
  %v136 = vpop.f32.mrf.mxu0
  %v137 = vadd.f32 %v60, %v136
  %v138 = vpop.f32.mrf.mxu0
  %139 = vdwg.mxu0
  %140 = vmatprep.subr.mxu0 0.0
  %141 = vmatpush1.msra.mxu0 0.0
  %142 = vmatprep.subr.mxu0 0.0
  %143 = vmatpush1.msra.mxu0 0.0
  %144 = vmatprep.subr.mxu0 0.0
  %145 = vmatpush1.msra.mxu0 0.0
  %146 = vmatprep.subr.mxu0 0.0
  %147 = vmatpush1.msra.mxu0 0.0
  %148 = vmatprep.subr.mxu0 0.0
  %149 = vmatpush1.msra.mxu0 0.0
  %150 = vmatprep.subr.mxu0 0.0
  %151 = vmatpush1.msra.mxu0 0.0
  %152 = vmatprep.subr.mxu0 0.0
  %153 = vmatpush1.msra.mxu0 0.0
  %154 = vmatprep.subr.mxu0 0.0
  %155 = vmatpush1.msra.mxu0 0.0
  %156 = vmatprep.subr.mxu0 0.0
  %157 = vmatpush1.msra.mxu0 0.0
  %158 = vmatprep.subr.mxu0 0.0
  %159 = vmatpush1.msra.mxu0 0.0
  %160 = vmatprep.subr.mxu0 0.0
  %161 = vmatpush1.msra.mxu0 %v68
  %162 = vmatprep.subr.mxu0 0.0
  %163 = vmatpush1.msra.mxu0 %v53
  %164 = vmatprep.subr.mxu0 0.0
  %165 = vmatpush1.msra.mxu0 %v52
  %166 = vmatprep.subr.mxu0 0.0
  %167 = vmatpush1.msra.mxu0 %v51
  %168 = vmatprep.subr.mxu0 0.0
  %169 = vmatpush1.msra.mxu0 %v50
  %170 = vmatprep.subr.mxu0 0.0
  %171 = vmatpush1.msra.mxu0 %v49
  %172 = vmatprep.subr.mxu0 0.0
  %173 = vmatpush2.msra.mxu0 0.0
  %174 = vmatprep.subr.mxu0 0.0
  %175 = vmatpush2.msra.mxu0 0.0
  %176 = vmatprep.subr.mxu0 0.0
  %177 = vmatpush2.msra.mxu0 0.0
  %178 = vmatprep.subr.mxu0 0.0
  %179 = vmatpush2.msra.mxu0 0.0
  %180 = vmatprep.subr.mxu0 0.0
  %181 = vmatpush2.msra.mxu0 0.0
  %182 = vmatprep.subr.mxu0 0.0
  %183 = vmatpush2.msra.mxu0 0.0
  %184 = vmatprep.subr.mxu0 0.0
  %185 = vmatpush2.msra.mxu0 0.0
  %186 = vmatprep.subr.mxu0 0.0
  %187 = vmatpush2.msra.mxu0 0.0
  %188 = vmatprep.subr.mxu0 0.0
  %189 = vmatpush2.msra.mxu0 0.0
  %190 = vmatprep.subr.mxu0 0.0
  %191 = vmatpush2.msra.mxu0 0.0
  %192 = vmatprep.subr.mxu0 0.0
  %193 = vmatpush2.msra.mxu0 0.0
  %194 = vmatprep.subr.mxu0 0.0
  %195 = vmatpush2.msra.mxu0 0.0
  %196 = vmatprep.subr.mxu0 0.0
  %197 = vmatpush2.msra.mxu0 0.0
  %198 = vmatprep.subr.mxu0 0.0
  %199 = vmatpush2.msra.mxu0 0.0
  %200 = vmatprep.subr.mxu0 0.0
  %201 = vmatpush2.msra.mxu0 0.0
  %202 = vmatprep.subr.mxu0 0.0
  %203 = vmatpush2.msra.mxu0 0.0
  %204 = vmatprep.mubr.f32.mxu0 0.0
  %205 = vmatmul.mubr.f32.gmra.mxu0 %v64
  %v206 = vpop.f32.mrf.mxu0
  %v207 = vadd.f32 %v137, %v206
  %v208 = vpop.f32.mrf.mxu0
  %209 = vdwg.mxu0
  %vm210 = vcmask 31744
  %211 = vst.msk [vmem:[%s3] sm:$0xff] %vm210, %v207
  // Predicated region
  $region14: #{_linear_forward.1} parent=0 // pred_check
    _
  $region15: #{_linear_forward.1} parent=0 // pred_check_branch
    %213 = sbr.rel (0) target = $region17
  $region16: #{_linear_forward.1} parent=0 // pred_region
    _
  $region17: #{_linear_forward.1} parent=0 // pred_fallthru
    _
  // Predicated region
  $region18: #{_linear_forward.1} parent=0 // pred_check
    _
  $region19: #{_linear_forward.1} parent=0 // pred_check_branch
    %215 = sbr.rel (0) target = $region21
  $region20: #{_linear_forward.1} parent=0 // pred_region
    _
  $region21: #{_linear_forward.1} parent=0 // pred_fallthru
    _

</llo_original>
